<compile_context>
chip_gen: v7x
topology: tpu7x:2x2x1
jax: 0.10.0
libtpu: 0.0.40
codegen_flags: <defaults>
</compile_context>

<pallas_src>
import jax
import jax.numpy as jnp
from jax.experimental import pallas as pl
from jax.experimental.pallas import tpu as pltpu

IN_DIM = 2048
REDUCED_DIM = 128   # reduced_dim hyperparameter of ApproximateFC
OUT_DIM = 100       # final nn.Linear(reduced_dim, 100)


def _round_up(x, m):
    return ((x + m - 1) // m) * m


def approx_fc_kernel(x_ref, wp_ref, bp_ref, wl_ref, bl_ref, o_ref):
    # Stage 1: random projection  h = x @ Wp + bp  -> (TB, REDUCED_DIM)
    # x/Wp are cast to bf16 in VMEM (free VPU work under the DMA); MXU
    # accumulates in f32, bias add in f32.
    x_bf = x_ref[...].astype(jnp.bfloat16)
    wp_bf = wp_ref[...].astype(jnp.bfloat16)
    h = jnp.dot(x_bf, wp_bf, preferred_element_type=jnp.float32)
    h = h + bp_ref[...]                          # (1, R) broadcasts over batch rows

    # Stage 2: approximate linear  y = h @ Wl + bl -> (TB, OUT_DIM)
    # bf16 operands + f32 accumulation (avoids the f32xf32 multi-pass MXU
    # sequence on v5e); bias add stays f32.
    y = jnp.dot(h.astype(jnp.bfloat16), wl_ref[...].astype(jnp.bfloat16),
                preferred_element_type=jnp.float32)
    y = y + bl_ref[...]
    o_ref[...] = y.astype(o_ref.dtype)


def approximate_fc(x, wp, bp, wl, bl, *, block_b=1024):
    """Forward pass of ApproximateFC.

    x:  (B, IN_DIM) f32
    wp: (IN_DIM, REDUCED_DIM) f32   projection weight, pre-transposed to (in, out)
    bp: (REDUCED_DIM,) f32
    wl: (REDUCED_DIM, OUT_DIM) f32  linear weight, pre-transposed to (in, out)
    bl: (OUT_DIM,) f32
    Returns (B, OUT_DIM) f32.
    """
    B = x.shape[0]
    # Batch tile: multiple of 8 sublanes, capped at block_b. tb=1024 (f32 x
    # tile 8 MiB, double-buffered) fits comfortably under a 32 MiB scoped VMEM
    # limit on v5e/v6e/v7x while amortizing per-step overhead.
    tb = min(block_b, _round_up(B, 8))
    grid = (pl.cdiv(B, tb),)   # partial last block is masked by Pallas; no padding pass

    bp_r = bp.astype(jnp.float32).reshape(1, REDUCED_DIM)
    bl_r = bl.astype(jnp.float32).reshape(1, OUT_DIM)

    out = pl.pallas_call(
        approx_fc_kernel,
        out_shape=jax.ShapeDtypeStruct((B, OUT_DIM), jnp.float32),
        grid_spec=pltpu.PrefetchScalarGridSpec(
            num_scalar_prefetch=0,
            grid=grid,
            in_specs=[
                pl.BlockSpec((tb, IN_DIM), lambda i: (i, 0)),            # x tile
                pl.BlockSpec((IN_DIM, REDUCED_DIM), lambda i: (0, 0)),   # wp (resident)
                pl.BlockSpec((1, REDUCED_DIM), lambda i: (0, 0)),        # bp (resident)
                pl.BlockSpec((REDUCED_DIM, OUT_DIM), lambda i: (0, 0)),  # wl (resident)
                pl.BlockSpec((1, OUT_DIM), lambda i: (0, 0)),            # bl (resident)
            ],
            # Full-array last dim (100) is legal; masked vst beats an extra
            # slice pass on this DMA-bound kernel.
            out_specs=pl.BlockSpec((tb, OUT_DIM), lambda i: (i, 0)),
        ),
        compiler_params=pltpu.CompilerParams(
            dimension_semantics=("parallel",),      # independent batch tiles
            vmem_limit_bytes=32 * 1024 * 1024,
        ),
    )(x, wp, bp_r, wl, bl_r)
    return out


def init_params(key):
    """Parameter init matching the PyTorch module's __init__.

    projection: weight (REDUCED_DIM, IN_DIM) ~ N(0, 1), bias (REDUCED_DIM,) ~ N(0, 1)
    linear:     weight (OUT_DIM, REDUCED_DIM), bias (OUT_DIM,)  PyTorch-default
                uniform(-1/sqrt(fan_in), 1/sqrt(fan_in))
    Weights are returned pre-transposed to (in, out) for the kernel.
    """
    k1, k2, k3, k4 = jax.random.split(key, 4)
    wp = jax.random.normal(k1, (REDUCED_DIM, IN_DIM), dtype=jnp.float32)   # (out, in)
    bp = jax.random.normal(k2, (REDUCED_DIM,), dtype=jnp.float32)
    bound = 1.0 / jnp.sqrt(jnp.float32(REDUCED_DIM))
    wl = jax.random.uniform(k3, (OUT_DIM, REDUCED_DIM), dtype=jnp.float32,
                            minval=-bound, maxval=bound)                   # (out, in)
    bl = jax.random.uniform(k4, (OUT_DIM,), dtype=jnp.float32,
                            minval=-bound, maxval=bound)
    return wp.T, bp, wl.T, bl


def reference_f32(x, wp, bp, wl, bl):
    h = x @ wp + bp.reshape(1, -1)
    return h @ wl + bl.reshape(1, -1)


def reference_mixed(x, wp, bp, wl, bl):
    # Same mixed-precision path as the kernel: bf16 matmul operands, f32
    # accumulation, f32 bias adds.
    h = jnp.dot(x.astype(jnp.bfloat16), wp.astype(jnp.bfloat16),
                preferred_element_type=jnp.float32) + bp.reshape(1, -1)
    y = jnp.dot(h.astype(jnp.bfloat16), wl.astype(jnp.bfloat16),
                preferred_element_type=jnp.float32) + bl.reshape(1, -1)
    return y


if __name__ == "__main__":
    key = jax.random.PRNGKey(0)
    kx, kp, kx2 = jax.random.split(key, 3)

    wp, bp, wl, bl = init_params(kp)

    # Small single-tile case.
    B = 8
    x = jax.random.normal(kx, (B, IN_DIM), dtype=jnp.float32)
    y = approximate_fc(x, wp, bp, wl, bl)
    jax.block_until_ready(y)
    assert y.shape == (B, OUT_DIM)
    y_mixed = reference_mixed(x, wp, bp, wl, bl)
    assert jnp.allclose(y, y_mixed, atol=1e-1, rtol=2e-2), "mismatch vs mixed-precision reference"
    y_f32 = reference_f32(x, wp, bp, wl, bl)
    assert jnp.allclose(y, y_f32, atol=1.0, rtol=5e-2), "drift vs f32 reference"

    # Multi-tile case with ragged batch (exercises cdiv grid + partial-block masking).
    B2 = 520
    x2 = jax.random.normal(kx2, (B2, IN_DIM), dtype=jnp.float32)
    y2 = approximate_fc(x2, wp, bp, wl, bl, block_b=256)
    jax.block_until_ready(y2)
    assert y2.shape == (B2, OUT_DIM)
    y2_mixed = reference_mixed(x2, wp, bp, wl, bl)
    assert jnp.allclose(y2, y2_mixed, atol=1e-1, rtol=2e-2), "mismatch vs mixed-precision reference (tiled)"

    print("KERNEL_OK")
</pallas_src>

<mosaic_0001>
module attributes {stable_mosaic.version = 11 : i64} {
  func.func @approx_fc_kernel(%arg0: i32, %arg1: memref<8x2048xf32, #tpu.memory_space<vmem>>, %arg2: memref<2048x128xf32, #tpu.memory_space<vmem>>, %arg3: memref<1x128xf32, #tpu.memory_space<vmem>>, %arg4: memref<128x100xf32, #tpu.memory_space<vmem>>, %arg5: memref<1x100xf32, #tpu.memory_space<vmem>>, %arg6: memref<8x100xf32, #tpu.memory_space<vmem>>) attributes {dimension_semantics = [#tpu.dimension_semantics<parallel>], iteration_bounds = array<i64: 1>, scalar_prefetch = 0 : i64, scratch_operands = 0 : i64, tpu.core_type = #tpu.core_type<tc>, window_params = [{transform_indices = @transform_0, window_bounds = array<i64: 8, 2048>}, {pipeline_mode = #tpu.pipeline_mode<synchronous>, transform_indices = @transform_1, window_bounds = array<i64: 2048, 128>}, {pipeline_mode = #tpu.pipeline_mode<synchronous>, transform_indices = @transform_2, window_bounds = array<i64: 1, 128>}, {pipeline_mode = #tpu.pipeline_mode<synchronous>, transform_indices = @transform_3, window_bounds = array<i64: 128, 100>}, {pipeline_mode = #tpu.pipeline_mode<synchronous>, transform_indices = @transform_4, window_bounds = array<i64: 1, 100>}, {transform_indices = @transform_5, window_bounds = array<i64: 8, 100>}]} {
    %c0 = arith.constant 0 : index
    %c0_0 = arith.constant 0 : index
    %0 = vector.load %arg1[%c0, %c0_0] : memref<8x2048xf32, #tpu.memory_space<vmem>>, vector<8x2048xf32>
    %1 = arith.truncf %0 : vector<8x2048xf32> to vector<8x2048xbf16>
    %c0_1 = arith.constant 0 : index
    %c0_2 = arith.constant 0 : index
    %2 = vector.load %arg2[%c0_1, %c0_2] : memref<2048x128xf32, #tpu.memory_space<vmem>>, vector<2048x128xf32>
    %3 = arith.truncf %2 : vector<2048x128xf32> to vector<2048x128xbf16>
    %cst = arith.constant dense<0.000000e+00> : vector<8x128xf32>
    %4 = tpu.matmul %1, %3, %cst {dimension_numbers = #tpu.dot_dimension_numbers<[1], [0], [0], [1], [0, 0, 1, 1], [], []>} : vector<8x2048xbf16>, vector<2048x128xbf16>, vector<8x128xf32> -> vector<8x128xf32>
    %c0_3 = arith.constant 0 : index
    %c0_4 = arith.constant 0 : index
    %5 = vector.load %arg3[%c0_3, %c0_4] : memref<1x128xf32, #tpu.memory_space<vmem>>, vector<1x128xf32>
    %6 = vector.broadcast %5 : vector<1x128xf32> to vector<8x128xf32>
    %7 = arith.addf %4, %6 : vector<8x128xf32>
    %8 = arith.truncf %7 : vector<8x128xf32> to vector<8x128xbf16>
    %c0_5 = arith.constant 0 : index
    %c0_6 = arith.constant 0 : index
    %9 = vector.load %arg4[%c0_5, %c0_6] : memref<128x100xf32, #tpu.memory_space<vmem>>, vector<128x100xf32>
    %10 = arith.truncf %9 : vector<128x100xf32> to vector<128x100xbf16>
    %cst_7 = arith.constant dense<0.000000e+00> : vector<8x100xf32>
    %11 = tpu.matmul %8, %10, %cst_7 {dimension_numbers = #tpu.dot_dimension_numbers<[1], [0], [0], [1], [0, 0, 1, 1], [], []>} : vector<8x128xbf16>, vector<128x100xbf16>, vector<8x100xf32> -> vector<8x100xf32>
    %c0_8 = arith.constant 0 : index
    %c0_9 = arith.constant 0 : index
    %12 = vector.load %arg5[%c0_8, %c0_9] : memref<1x100xf32, #tpu.memory_space<vmem>>, vector<1x100xf32>
    %13 = vector.broadcast %12 : vector<1x100xf32> to vector<8x100xf32>
    %14 = arith.addf %11, %13 : vector<8x100xf32>
    %c0_10 = arith.constant 0 : index
    %c0_11 = arith.constant 0 : index
    %15 = vector.load %arg6[%c0_10, %c0_11] : memref<8x100xf32, #tpu.memory_space<vmem>>, vector<8x100xf32>
    tpu.vector_store %arg6[%c0_10, %c0_11], %14 {strides = array<i32>} : memref<8x100xf32, #tpu.memory_space<vmem>>, vector<8x100xf32>,
    return
  }
  func.func @transform_0(%arg0: i32) -> (i32, i32) {
    %c0_i32 = arith.constant 0 : i32
    %c0_i32_0 = arith.constant 0 : i32
    return %arg0, %c0_i32 : i32, i32
  }
  func.func @transform_1(%arg0: i32) -> (i32, i32) {
    %c0_i32 = arith.constant 0 : i32
    %c0_i32_0 = arith.constant 0 : i32
    %c0_i32_1 = arith.constant 0 : i32
    return %c0_i32, %c0_i32_0 : i32, i32
  }
  func.func @transform_2(%arg0: i32) -> (i32, i32) {
    %c0_i32 = arith.constant 0 : i32
    %c0_i32_0 = arith.constant 0 : i32
    %c0_i32_1 = arith.constant 0 : i32
    return %c0_i32, %c0_i32_0 : i32, i32
  }
  func.func @transform_3(%arg0: i32) -> (i32, i32) {
    %c0_i32 = arith.constant 0 : i32
    %c0_i32_0 = arith.constant 0 : i32
    %c0_i32_1 = arith.constant 0 : i32
    return %c0_i32, %c0_i32_0 : i32, i32
  }
  func.func @transform_4(%arg0: i32) -> (i32, i32) {
    %c0_i32 = arith.constant 0 : i32
    %c0_i32_0 = arith.constant 0 : i32
    %c0_i32_1 = arith.constant 0 : i32
    return %c0_i32, %c0_i32_0 : i32, i32
  }
  func.func @transform_5(%arg0: i32) -> (i32, i32) {
    %c0_i32 = arith.constant 0 : i32
    %c0_i32_0 = arith.constant 0 : i32
    return %arg0, %c0_i32 : i32, i32
  }
}

</mosaic_0001>

<llo_original>
// kernel: tpu_custom_call.1
$region0: #{tpu_custom_call.1}
  #allocation0 [shape = 'u32[]', space=smem, size = 0x4, offset = 0x4, fixed_abs, tag = 'smem constant byte address 0x4 - core index']
  #allocation1 [shape = 'u32[144,128]{1,0:T(1,128)}', space=vmem, size = 0x12000, scoped, tag = 'internal scratch']
  %s0 = inlined_call_operand.vmem [shape: f32[8,2048], index: 0, kind: input, shape index: {}]
  %s1 = inlined_call_operand.hbm [shape: f32[2048,128], index: 1, kind: input, shape index: {}]
  %s2 = inlined_call_operand.vmem [shape: f32[1,128], index: 2, kind: input, shape index: {}]
  %s3 = inlined_call_operand.vmem [shape: f32[128,100], index: 3, kind: input, shape index: {}]
  %s4 = inlined_call_operand.vmem [shape: f32[1,100], index: 4, kind: input, shape index: {}]
  %s5 = inlined_call_operand.hbm [shape: f32[8,100], index: 5, kind: output, shape index: {}]
  %s6 = sld [smem:[#allocation0]]
  $region34: #{tpu_custom_call.1} parent=0
    _
  %s8 = ssub.s32 1, %s6
  %s9 = scalar_select 0, %s8, %s6
  $region1: #{tpu_custom_call.1} parent=0
    #allocation2 [shape = 'u8[1048576]{0}', space=vmem, size = 0x100000, scoped, tag = 'input window, operand 1, single buffered']
    #allocation3 [shape = 's32[1]{0}', space=sflag, size = 0x4, scoped, tag = 'scoped memory for tpu_custom_call.1']
    #allocation4 [shape = 's32[1]{0}', space=sflag, size = 0x4, scoped, tag = 'scoped memory for tpu_custom_call.1']
    #allocation5 [shape = 'u8[4096]{0}', space=vmem, size = 0x1000, scoped, tag = 'output window, operand 0, single buffered']
    %10 = vsyncpa [#allocation3], 0
    %11 = vsyncpa [#allocation4], 0
    // Predicated region
    $region2: #{tpu_custom_call.1} parent=1 // pred_check
      _
    $region3: #{tpu_custom_call.1} parent=1 // pred_check_branch
      %13 = sbr.rel (0) target = $region5
    $region4: #{tpu_custom_call.1} parent=1 // pred_region
      _
    $region5: #{tpu_custom_call.1} parent=1 // pred_fallthru
      _
    // Predicated region
    $region6: #{tpu_custom_call.1} parent=1 // pred_check
      _
    $region7: #{tpu_custom_call.1} parent=1 // pred_check_branch
      %15 = sbr.rel (0) target = $region9
    $region8: #{tpu_custom_call.1} parent=1 // pred_region
      %s17 = ssub.s32 32768, 32768
      %18 = vsyncadd [#allocation3], %s17
      %s19 = sshll.u32 [#allocation2], 4
      %s20 = int_to_ptr.vmem [resolvable:$true] %s19
      %25 = dma.hbm_to_vmem [thread:$0]  %s1, 32768, %s20, [#allocation3], 128, 128, 8
    $region9: #{tpu_custom_call.1} parent=1 // pred_fallthru
      _
    // Predicated region
    $region10: #{tpu_custom_call.1} parent=1 // pred_check
      _
    $region11: #{tpu_custom_call.1} parent=1 // pred_check_branch
      %27 = sbr.rel (0) target = $region13
    $region12: #{tpu_custom_call.1} parent=1 // pred_region
      _
    $region13: #{tpu_custom_call.1} parent=1 // pred_fallthru
      _
    // Predicated region
    $region14: #{tpu_custom_call.1} parent=1 // pred_check
      _
    $region15: #{tpu_custom_call.1} parent=1 // pred_check_branch
      %29 = sbr.rel (0) target = $region17
    $region16: #{tpu_custom_call.1} parent=1 // pred_region
      _
    $region17: #{tpu_custom_call.1} parent=1 // pred_fallthru
      _
    // Predicated region
    $region18: #{tpu_custom_call.1} parent=1 // pred_check
      _
    $region19: #{tpu_custom_call.1} parent=1 // pred_check_branch
      %31 = sbr.rel (0) target = $region21
    $region20: #{tpu_custom_call.1} parent=1 // pred_region
      _
    $region21: #{tpu_custom_call.1} parent=1 // pred_fallthru
      _
    // Predicated region
    $region22: #{tpu_custom_call.1} parent=1 // pred_check
      _
    $region23: #{tpu_custom_call.1} parent=1 // pred_check_branch
      %33 = sbr.rel (0) target = $region25
    $region24: #{tpu_custom_call.1} parent=1 // pred_region
      %34 = dma.done [#allocation3], 32768
    $region25: #{tpu_custom_call.1} parent=1 // pred_fallthru
      _
    %v36 = vld [vmem:[%s0] sm:$0xff]
    %v37 = vld [vmem:[%s0 + $0x8] sm:$0xff]
    %v38 = vld [vmem:[%s0 + $0x10] sm:$0xff]
    %v39 = vld [vmem:[%s0 + $0x18] sm:$0xff]
    %v40 = vld [vmem:[%s0 + $0x20] sm:$0xff]
    %v41 = vld [vmem:[%s0 + $0x28] sm:$0xff]
    %v42 = vld [vmem:[%s0 + $0x30] sm:$0xff]
    %v43 = vld [vmem:[%s0 + $0x38] sm:$0xff]
    %v44 = vld [vmem:[%s0 + $0x40] sm:$0xff]
    %v45 = vld [vmem:[%s0 + $0x48] sm:$0xff]
    %v46 = vld [vmem:[%s0 + $0x50] sm:$0xff]
    %v47 = vld [vmem:[%s0 + $0x58] sm:$0xff]
    %v48 = vld [vmem:[%s0 + $0x60] sm:$0xff]
    %v49 = vld [vmem:[%s0 + $0x68] sm:$0xff]
    %v50 = vld [vmem:[%s0 + $0x70] sm:$0xff]
    %v51 = vld [vmem:[%s0 + $0x78] sm:$0xff]
    %v52 = vpack.c.bf16 %v36, %v36
    %v53 = vpack.c.bf16 %v37, %v37
    %v54 = vpack.c.bf16 %v38, %v38
    %v55 = vpack.c.bf16 %v39, %v39
    %v56 = vpack.c.bf16 %v40, %v40
    %v57 = vpack.c.bf16 %v41, %v41
    %v58 = vpack.c.bf16 %v42, %v42
    %v59 = vpack.c.bf16 %v43, %v43
    %v60 = vpack.c.bf16 %v44, %v44
    %v61 = vpack.c.bf16 %v45, %v45
    %v62 = vpack.c.bf16 %v46, %v46
    %v63 = vpack.c.bf16 %v47, %v47
    %v64 = vpack.c.bf16 %v48, %v48
    %v65 = vpack.c.bf16 %v49, %v49
    %v66 = vpack.c.bf16 %v50, %v50
    %v67 = vpack.c.bf16 %v51, %v51
    %v68 = vld [vmem:[#allocation2] sm:$0xff]
    %v69 = vld [vmem:[#allocation2 + $0x8] sm:$0xff]
    %v70 = vld [vmem:[#allocation2 + $0x10] sm:$0xff]
    %v71 = vld [vmem:[#allocation2 + $0x18] sm:$0xff]
    %v72 = vld [vmem:[#allocation2 + $0x20] sm:$0xff]
    %v73 = vld [vmem:[#allocation2 + $0x28] sm:$0xff]
    %v74 = vld [vmem:[#allocation2 + $0x30] sm:$0xff]
    %v75 = vld [vmem:[#allocation2 + $0x38] sm:$0xff]
    %v76 = vld [vmem:[#allocation2 + $0x40] sm:$0xff]
    %v77 = vld [vmem:[#allocation2 + $0x48] sm:$0xff]
    %v78 = vld [vmem:[#allocation2 + $0x50] sm:$0xff]
    %v79 = vld [vmem:[#allocation2 + $0x58] sm:$0xff]
    %v80 = vld [vmem:[#allocation2 + $0x60] sm:$0xff]
    %v81 = vld [vmem:[#allocation2 + $0x68] sm:$0xff]
    %v82 = vld [vmem:[#allocation2 + $0x70] sm:$0xff]
    %v83 = vld [vmem:[#allocation2 + $0x78] sm:$0xff]
    %v84 = vld [vmem:[#allocation2 + $0x80] sm:$0xff]
    %v85 = vld [vmem:[#allocation2 + $0x88] sm:$0xff]
    %v86 = vld [vmem:[#allocation2 + $0x90] sm:$0xff]
    %v87 = vld [vmem:[#allocation2 + $0x98] sm:$0xff]
    %v88 = vld [vmem:[#allocation2 + $0xa0] sm:$0xff]
    %v89 = vld [vmem:[#allocation2 + $0xa8] sm:$0xff]
    %v90 = vld [vmem:[#allocation2 + $0xb0] sm:$0xff]
    %v91 = vld [vmem:[#allocation2 + $0xb8] sm:$0xff]
    %v92 = vld [vmem:[#allocation2 + $0xc0] sm:$0xff]
    %v93 = vld [vmem:[#allocation2 + $0xc8] sm:$0xff]
    %v94 = vld [vmem:[#allocation2 + $0xd0] sm:$0xff]
    %v95 = vld [vmem:[#allocation2 + $0xd8] sm:$0xff]
    %v96 = vld [vmem:[#allocation2 + $0xe0] sm:$0xff]
    %v97 = vld [vmem:[#allocation2 + $0xe8] sm:$0xff]
    %v98 = vld [vmem:[#allocation2 + $0xf0] sm:$0xff]
    %v99 = vld [vmem:[#allocation2 + $0xf8] sm:$0xff]
    %v100 = vld [vmem:[#allocation2 + $0x100] sm:$0xff]
    %v101 = vld [vmem:[#allocation2 + $0x108] sm:$0xff]
    %v102 = vld [vmem:[#allocation2 + $0x110] sm:$0xff]
    %v103 = vld [vmem:[#allocation2 + $0x118] sm:$0xff]
    %v104 = vld [vmem:[#allocation2 + $0x120] sm:$0xff]
    %v105 = vld [vmem:[#allocation2 + $0x128] sm:$0xff]
    %v106 = vld [vmem:[#allocation2 + $0x130] sm:$0xff]
    %v107 = vld [vmem:[#allocation2 + $0x138] sm:$0xff]
    %v108 = vld [vmem:[#allocation2 + $0x140] sm:$0xff]
    %v109 = vld [vmem:[#allocation2 + $0x148] sm:$0xff]
    %v110 = vld [vmem:[#allocation2 + $0x150] sm:$0xff]
    %v111 = vld [vmem:[#allocation2 + $0x158] sm:$0xff]
    %v112 = vld [vmem:[#allocation2 + $0x160] sm:$0xff]
    %v113 = vld [vmem:[#allocation2 + $0x168] sm:$0xff]
    %v114 = vld [vmem:[#allocation2 + $0x170] sm:$0xff]
    %v115 = vld [vmem:[#allocation2 + $0x178] sm:$0xff]
    %v116 = vld [vmem:[#allocation2 + $0x180] sm:$0xff]
    %v117 = vld [vmem:[#allocation2 + $0x188] sm:$0xff]
    %v118 = vld [vmem:[#allocation2 + $0x190] sm:$0xff]
    %v119 = vld [vmem:[#allocation2 + $0x198] sm:$0xff]
    %v120 = vld [vmem:[#allocation2 + $0x1a0] sm:$0xff]
    %v121 = vld [vmem:[#allocation2 + $0x1a8] sm:$0xff]
    %v122 = vld [vmem:[#allocation2 + $0x1b0] sm:$0xff]
    %v123 = vld [vmem:[#allocation2 + $0x1b8] sm:$0xff]
    %v124 = vld [vmem:[#allocation2 + $0x1c0] sm:$0xff]
    %v125 = vld [vmem:[#allocation2 + $0x1c8] sm:$0xff]
    %v126 = vld [vmem:[#allocation2 + $0x1d0] sm:$0xff]
    %v127 = vld [vmem:[#allocation2 + $0x1d8] sm:$0xff]
    %v128 = vld [vmem:[#allocation2 + $0x1e0] sm:$0xff]
    %v129 = vld [vmem:[#allocation2 + $0x1e8] sm:$0xff]
    %v130 = vld [vmem:[#allocation2 + $0x1f0] sm:$0xff]
    %v131 = vld [vmem:[#allocation2 + $0x1f8] sm:$0xff]
    %v132 = vld [vmem:[#allocation2 + $0x200] sm:$0xff]
    %v133 = vld [vmem:[#allocation2 + $0x208] sm:$0xff]
    %v134 = vld [vmem:[#allocation2 + $0x210] sm:$0xff]
    %v135 = vld [vmem:[#allocation2 + $0x218] sm:$0xff]
    %v136 = vld [vmem:[#allocation2 + $0x220] sm:$0xff]
    %v137 = vld [vmem:[#allocation2 + $0x228] sm:$0xff]
    %v138 = vld [vmem:[#allocation2 + $0x230] sm:$0xff]
    %v139 = vld [vmem:[#allocation2 + $0x238] sm:$0xff]
    %v140 = vld [vmem:[#allocation2 + $0x240] sm:$0xff]
    %v141 = vld [vmem:[#allocation2 + $0x248] sm:$0xff]
    %v142 = vld [vmem:[#allocation2 + $0x250] sm:$0xff]
    %v143 = vld [vmem:[#allocation2 + $0x258] sm:$0xff]
    %v144 = vld [vmem:[#allocation2 + $0x260] sm:$0xff]
    %v145 = vld [vmem:[#allocation2 + $0x268] sm:$0xff]
    %v146 = vld [vmem:[#allocation2 + $0x270] sm:$0xff]
    %v147 = vld [vmem:[#allocation2 + $0x278] sm:$0xff]
    %v148 = vld [vmem:[#allocation2 + $0x280] sm:$0xff]
    %v149 = vld [vmem:[#allocation2 + $0x288] sm:$0xff]
    %v150 = vld [vmem:[#allocation2 + $0x290] sm:$0xff]
    %v151 = vld [vmem:[#allocation2 + $0x298] sm:$0xff]
    %v152 = vld [vmem:[#allocation2 + $0x2a0] sm:$0xff]
    %v153 = vld [vmem:[#allocation2 + $0x2a8] sm:$0xff]
    %v154 = vld [vmem:[#allocation2 + $0x2b0] sm:$0xff]
    %v155 = vld [vmem:[#allocation2 + $0x2b8] sm:$0xff]
    %v156 = vld [vmem:[#allocation2 + $0x2c0] sm:$0xff]
    %v157 = vld [vmem:[#allocation2 + $0x2c8] sm:$0xff]
    %v158 = vld [vmem:[#allocation2 + $0x2d0] sm:$0xff]
    %v159 = vld [vmem:[#allocation2 + $0x2d8] sm:$0xff]
    %v160 = vld [vmem:[#allocation2 + $0x2e0] sm:$0xff]
    %v161 = vld [vmem:[#allocation2 + $0x2e8] sm:$0xff]
    %v162 = vld [vmem:[#allocation2 + $0x2f0] sm:$0xff]
    %v163 = vld [vmem:[#allocation2 + $0x2f8] sm:$0xff]
    %v164 = vld [vmem:[#allocation2 + $0x300] sm:$0xff]
    %v165 = vld [vmem:[#allocation2 + $0x308] sm:$0xff]
    %v166 = vld [vmem:[#allocation2 + $0x310] sm:$0xff]
    %v167 = vld [vmem:[#allocation2 + $0x318] sm:$0xff]
    %v168 = vld [vmem:[#allocation2 + $0x320] sm:$0xff]
    %v169 = vld [vmem:[#allocation2 + $0x328] sm:$0xff]
    %v170 = vld [vmem:[#allocation2 + $0x330] sm:$0xff]
    %v171 = vld [vmem:[#allocation2 + $0x338] sm:$0xff]
    %v172 = vld [vmem:[#allocation2 + $0x340] sm:$0xff]
    %v173 = vld [vmem:[#allocation2 + $0x348] sm:$0xff]
    %v174 = vld [vmem:[#allocation2 + $0x350] sm:$0xff]
    %v175 = vld [vmem:[#allocation2 + $0x358] sm:$0xff]
    %v176 = vld [vmem:[#allocation2 + $0x360] sm:$0xff]
    %v177 = vld [vmem:[#allocation2 + $0x368] sm:$0xff]
    %v178 = vld [vmem:[#allocation2 + $0x370] sm:$0xff]
    %v179 = vld [vmem:[#allocation2 + $0x378] sm:$0xff]
    %v180 = vld [vmem:[#allocation2 + $0x380] sm:$0xff]
    %v181 = vld [vmem:[#allocation2 + $0x388] sm:$0xff]
    %v182 = vld [vmem:[#allocation2 + $0x390] sm:$0xff]
    %v183 = vld [vmem:[#allocation2 + $0x398] sm:$0xff]
    %v184 = vld [vmem:[#allocation2 + $0x3a0] sm:$0xff]
    %v185 = vld [vmem:[#allocation2 + $0x3a8] sm:$0xff]
    %v186 = vld [vmem:[#allocation2 + $0x3b0] sm:$0xff]
    %v187 = vld [vmem:[#allocation2 + $0x3b8] sm:$0xff]
    %v188 = vld [vmem:[#allocation2 + $0x3c0] sm:$0xff]
    %v189 = vld [vmem:[#allocation2 + $0x3c8] sm:$0xff]
    %v190 = vld [vmem:[#allocation2 + $0x3d0] sm:$0xff]
    %v191 = vld [vmem:[#allocation2 + $0x3d8] sm:$0xff]
    %v192 = vld [vmem:[#allocation2 + $0x3e0] sm:$0xff]
    %v193 = vld [vmem:[#allocation2 + $0x3e8] sm:$0xff]
    %v194 = vld [vmem:[#allocation2 + $0x3f0] sm:$0xff]
    %v195 = vld [vmem:[#allocation2 + $0x3f8] sm:$0xff]
    %v196 = vld [vmem:[#allocation2 + $0x400] sm:$0xff]
    %v197 = vld [vmem:[#allocation2 + $0x408] sm:$0xff]
    %v198 = vld [vmem:[#allocation2 + $0x410] sm:$0xff]
    %v199 = vld [vmem:[#allocation2 + $0x418] sm:$0xff]
    %v200 = vld [vmem:[#allocation2 + $0x420] sm:$0xff]
    %v201 = vld [vmem:[#allocation2 + $0x428] sm:$0xff]
    %v202 = vld [vmem:[#allocation2 + $0x430] sm:$0xff]
    %v203 = vld [vmem:[#allocation2 + $0x438] sm:$0xff]
    %v204 = vld [vmem:[#allocation2 + $0x440] sm:$0xff]
    %v205 = vld [vmem:[#allocation2 + $0x448] sm:$0xff]
    %v206 = vld [vmem:[#allocation2 + $0x450] sm:$0xff]
    %v207 = vld [vmem:[#allocation2 + $0x458] sm:$0xff]
    %v208 = vld [vmem:[#allocation2 + $0x460] sm:$0xff]
    %v209 = vld [vmem:[#allocation2 + $0x468] sm:$0xff]
    %v210 = vld [vmem:[#allocation2 + $0x470] sm:$0xff]
    %v211 = vld [vmem:[#allocation2 + $0x478] sm:$0xff]
    %v212 = vld [vmem:[#allocation2 + $0x480] sm:$0xff]
    %v213 = vld [vmem:[#allocation2 + $0x488] sm:$0xff]
    %v214 = vld [vmem:[#allocation2 + $0x490] sm:$0xff]
    %v215 = vld [vmem:[#allocation2 + $0x498] sm:$0xff]
    %v216 = vld [vmem:[#allocation2 + $0x4a0] sm:$0xff]
    %v217 = vld [vmem:[#allocation2 + $0x4a8] sm:$0xff]
    %v218 = vld [vmem:[#allocation2 + $0x4b0] sm:$0xff]
    %v219 = vld [vmem:[#allocation2 + $0x4b8] sm:$0xff]
    %v220 = vld [vmem:[#allocation2 + $0x4c0] sm:$0xff]
    %v221 = vld [vmem:[#allocation2 + $0x4c8] sm:$0xff]
    %v222 = vld [vmem:[#allocation2 + $0x4d0] sm:$0xff]
    %v223 = vld [vmem:[#allocation2 + $0x4d8] sm:$0xff]
    %v224 = vld [vmem:[#allocation2 + $0x4e0] sm:$0xff]
    %v225 = vld [vmem:[#allocation2 + $0x4e8] sm:$0xff]
    %v226 = vld [vmem:[#allocation2 + $0x4f0] sm:$0xff]
    %v227 = vld [vmem:[#allocation2 + $0x4f8] sm:$0xff]
    %v228 = vld [vmem:[#allocation2 + $0x500] sm:$0xff]
    %v229 = vld [vmem:[#allocation2 + $0x508] sm:$0xff]
    %v230 = vld [vmem:[#allocation2 + $0x510] sm:$0xff]
    %v231 = vld [vmem:[#allocation2 + $0x518] sm:$0xff]
    %v232 = vld [vmem:[#allocation2 + $0x520] sm:$0xff]
    %v233 = vld [vmem:[#allocation2 + $0x528] sm:$0xff]
    %v234 = vld [vmem:[#allocation2 + $0x530] sm:$0xff]
    %v235 = vld [vmem:[#allocation2 + $0x538] sm:$0xff]
    %v236 = vld [vmem:[#allocation2 + $0x540] sm:$0xff]
    %v237 = vld [vmem:[#allocation2 + $0x548] sm:$0xff]
    %v238 = vld [vmem:[#allocation2 + $0x550] sm:$0xff]
    %v239 = vld [vmem:[#allocation2 + $0x558] sm:$0xff]
    %v240 = vld [vmem:[#allocation2 + $0x560] sm:$0xff]
    %v241 = vld [vmem:[#allocation2 + $0x568] sm:$0xff]
    %v242 = vld [vmem:[#allocation2 + $0x570] sm:$0xff]
    %v243 = vld [vmem:[#allocation2 + $0x578] sm:$0xff]
    %v244 = vld [vmem:[#allocation2 + $0x580] sm:$0xff]
    %v245 = vld [vmem:[#allocation2 + $0x588] sm:$0xff]
    %v246 = vld [vmem:[#allocation2 + $0x590] sm:$0xff]
    %v247 = vld [vmem:[#allocation2 + $0x598] sm:$0xff]
    %v248 = vld [vmem:[#allocation2 + $0x5a0] sm:$0xff]
    %v249 = vld [vmem:[#allocation2 + $0x5a8] sm:$0xff]
    %v250 = vld [vmem:[#allocation2 + $0x5b0] sm:$0xff]
    %v251 = vld [vmem:[#allocation2 + $0x5b8] sm:$0xff]
    %v252 = vld [vmem:[#allocation2 + $0x5c0] sm:$0xff]
    %v253 = vld [vmem:[#allocation2 + $0x5c8] sm:$0xff]
    %v254 = vld [vmem:[#allocation2 + $0x5d0] sm:$0xff]
    %v255 = vld [vmem:[#allocation2 + $0x5d8] sm:$0xff]
    %v256 = vld [vmem:[#allocation2 + $0x5e0] sm:$0xff]
    %v257 = vld [vmem:[#allocation2 + $0x5e8] sm:$0xff]
    %v258 = vld [vmem:[#allocation2 + $0x5f0] sm:$0xff]
    %v259 = vld [vmem:[#allocation2 + $0x5f8] sm:$0xff]
    %v260 = vld [vmem:[#allocation2 + $0x600] sm:$0xff]
    %v261 = vld [vmem:[#allocation2 + $0x608] sm:$0xff]
    %v262 = vld [vmem:[#allocation2 + $0x610] sm:$0xff]
    %v263 = vld [vmem:[#allocation2 + $0x618] sm:$0xff]
    %v264 = vld [vmem:[#allocation2 + $0x620] sm:$0xff]
    %v265 = vld [vmem:[#allocation2 + $0x628] sm:$0xff]
    %v266 = vld [vmem:[#allocation2 + $0x630] sm:$0xff]
    %v267 = vld [vmem:[#allocation2 + $0x638] sm:$0xff]
    %v268 = vld [vmem:[#allocation2 + $0x640] sm:$0xff]
    %v269 = vld [vmem:[#allocation2 + $0x648] sm:$0xff]
    %v270 = vld [vmem:[#allocation2 + $0x650] sm:$0xff]
    %v271 = vld [vmem:[#allocation2 + $0x658] sm:$0xff]
    %v272 = vld [vmem:[#allocation2 + $0x660] sm:$0xff]
    %v273 = vld [vmem:[#allocation2 + $0x668] sm:$0xff]
    %v274 = vld [vmem:[#allocation2 + $0x670] sm:$0xff]
    %v275 = vld [vmem:[#allocation2 + $0x678] sm:$0xff]
    %v276 = vld [vmem:[#allocation2 + $0x680] sm:$0xff]
    %v277 = vld [vmem:[#allocation2 + $0x688] sm:$0xff]
    %v278 = vld [vmem:[#allocation2 + $0x690] sm:$0xff]
    %v279 = vld [vmem:[#allocation2 + $0x698] sm:$0xff]
    %v280 = vld [vmem:[#allocation2 + $0x6a0] sm:$0xff]
    %v281 = vld [vmem:[#allocation2 + $0x6a8] sm:$0xff]
    %v282 = vld [vmem:[#allocation2 + $0x6b0] sm:$0xff]
    %v283 = vld [vmem:[#allocation2 + $0x6b8] sm:$0xff]
    %v284 = vld [vmem:[#allocation2 + $0x6c0] sm:$0xff]
    %v285 = vld [vmem:[#allocation2 + $0x6c8] sm:$0xff]
    %v286 = vld [vmem:[#allocation2 + $0x6d0] sm:$0xff]
    %v287 = vld [vmem:[#allocation2 + $0x6d8] sm:$0xff]
    %v288 = vld [vmem:[#allocation2 + $0x6e0] sm:$0xff]
    %v289 = vld [vmem:[#allocation2 + $0x6e8] sm:$0xff]
    %v290 = vld [vmem:[#allocation2 + $0x6f0] sm:$0xff]
    %v291 = vld [vmem:[#allocation2 + $0x6f8] sm:$0xff]
    %v292 = vld [vmem:[#allocation2 + $0x700] sm:$0xff]
    %v293 = vld [vmem:[#allocation2 + $0x708] sm:$0xff]
    %v294 = vld [vmem:[#allocation2 + $0x710] sm:$0xff]
    %v295 = vld [vmem:[#allocation2 + $0x718] sm:$0xff]
    %v296 = vld [vmem:[#allocation2 + $0x720] sm:$0xff]
    %v297 = vld [vmem:[#allocation2 + $0x728] sm:$0xff]
    %v298 = vld [vmem:[#allocation2 + $0x730] sm:$0xff]
    %v299 = vld [vmem:[#allocation2 + $0x738] sm:$0xff]
    %v300 = vld [vmem:[#allocation2 + $0x740] sm:$0xff]
    %v301 = vld [vmem:[#allocation2 + $0x748] sm:$0xff]
    %v302 = vld [vmem:[#allocation2 + $0x750] sm:$0xff]
    %v303 = vld [vmem:[#allocation2 + $0x758] sm:$0xff]
    %v304 = vld [vmem:[#allocation2 + $0x760] sm:$0xff]
    %v305 = vld [vmem:[#allocation2 + $0x768] sm:$0xff]
    %v306 = vld [vmem:[#allocation2 + $0x770] sm:$0xff]
    %v307 = vld [vmem:[#allocation2 + $0x778] sm:$0xff]
    %v308 = vld [vmem:[#allocation2 + $0x780] sm:$0xff]
    %v309 = vld [vmem:[#allocation2 + $0x788] sm:$0xff]
    %v310 = vld [vmem:[#allocation2 + $0x790] sm:$0xff]
    %v311 = vld [vmem:[#allocation2 + $0x798] sm:$0xff]
    %v312 = vld [vmem:[#allocation2 + $0x7a0] sm:$0xff]
    %v313 = vld [vmem:[#allocation2 + $0x7a8] sm:$0xff]
    %v314 = vld [vmem:[#allocation2 + $0x7b0] sm:$0xff]
    %v315 = vld [vmem:[#allocation2 + $0x7b8] sm:$0xff]
    %v316 = vld [vmem:[#allocation2 + $0x7c0] sm:$0xff]
    %v317 = vld [vmem:[#allocation2 + $0x7c8] sm:$0xff]
    %v318 = vld [vmem:[#allocation2 + $0x7d0] sm:$0xff]
    %v319 = vld [vmem:[#allocation2 + $0x7d8] sm:$0xff]
    %v320 = vld [vmem:[#allocation2 + $0x7e0] sm:$0xff]
    %v321 = vld [vmem:[#allocation2 + $0x7e8] sm:$0xff]
    %v322 = vld [vmem:[#allocation2 + $0x7f0] sm:$0xff]
    %v323 = vld [vmem:[#allocation2 + $0x7f8] sm:$0xff]
    %v324 = vpack.c.bf16 %v69, %v68
    %v325 = vpack.c.bf16 %v71, %v70
    %v326 = vpack.c.bf16 %v73, %v72
    %v327 = vpack.c.bf16 %v75, %v74
    %v328 = vpack.c.bf16 %v77, %v76
    %v329 = vpack.c.bf16 %v79, %v78
    %v330 = vpack.c.bf16 %v81, %v80
    %v331 = vpack.c.bf16 %v83, %v82
    %v332 = vpack.c.bf16 %v85, %v84
    %v333 = vpack.c.bf16 %v87, %v86
    %v334 = vpack.c.bf16 %v89, %v88
    %v335 = vpack.c.bf16 %v91, %v90
    %v336 = vpack.c.bf16 %v93, %v92
    %v337 = vpack.c.bf16 %v95, %v94
    %v338 = vpack.c.bf16 %v97, %v96
    %v339 = vpack.c.bf16 %v99, %v98
    %v340 = vpack.c.bf16 %v101, %v100
    %v341 = vpack.c.bf16 %v103, %v102
    %v342 = vpack.c.bf16 %v105, %v104
    %v343 = vpack.c.bf16 %v107, %v106
    %v344 = vpack.c.bf16 %v109, %v108
    %v345 = vpack.c.bf16 %v111, %v110
    %v346 = vpack.c.bf16 %v113, %v112
    %v347 = vpack.c.bf16 %v115, %v114
    %v348 = vpack.c.bf16 %v117, %v116
    %v349 = vpack.c.bf16 %v119, %v118
    %v350 = vpack.c.bf16 %v121, %v120
    %v351 = vpack.c.bf16 %v123, %v122
    %v352 = vpack.c.bf16 %v125, %v124
    %v353 = vpack.c.bf16 %v127, %v126
    %v354 = vpack.c.bf16 %v129, %v128
    %v355 = vpack.c.bf16 %v131, %v130
    %v356 = vpack.c.bf16 %v133, %v132
    %v357 = vpack.c.bf16 %v135, %v134
    %v358 = vpack.c.bf16 %v137, %v136
    %v359 = vpack.c.bf16 %v139, %v138
    %v360 = vpack.c.bf16 %v141, %v140
    %v361 = vpack.c.bf16 %v143, %v142
    %v362 = vpack.c.bf16 %v145, %v144
    %v363 = vpack.c.bf16 %v147, %v146
    %v364 = vpack.c.bf16 %v149, %v148
    %v365 = vpack.c.bf16 %v151, %v150
    %v366 = vpack.c.bf16 %v153, %v152
    %v367 = vpack.c.bf16 %v155, %v154
    %v368 = vpack.c.bf16 %v157, %v156
    %v369 = vpack.c.bf16 %v159, %v158
    %v370 = vpack.c.bf16 %v161, %v160
    %v371 = vpack.c.bf16 %v163, %v162
    %v372 = vpack.c.bf16 %v165, %v164
    %v373 = vpack.c.bf16 %v167, %v166
    %v374 = vpack.c.bf16 %v169, %v168
    %v375 = vpack.c.bf16 %v171, %v170
    %v376 = vpack.c.bf16 %v173, %v172
    %v377 = vpack.c.bf16 %v175, %v174
    %v378 = vpack.c.bf16 %v177, %v176
    %v379 = vpack.c.bf16 %v179, %v178
    %v380 = vpack.c.bf16 %v181, %v180
    %v381 = vpack.c.bf16 %v183, %v182
    %v382 = vpack.c.bf16 %v185, %v184
    %v383 = vpack.c.bf16 %v187, %v186
    %v384 = vpack.c.bf16 %v189, %v188
    %v385 = vpack.c.bf16 %v191, %v190
    %v386 = vpack.c.bf16 %v193, %v192
    %v387 = vpack.c.bf16 %v195, %v194
    %v388 = vpack.c.bf16 %v197, %v196
    %v389 = vpack.c.bf16 %v199, %v198
    %v390 = vpack.c.bf16 %v201, %v200
    %v391 = vpack.c.bf16 %v203, %v202
    %v392 = vpack.c.bf16 %v205, %v204
    %v393 = vpack.c.bf16 %v207, %v206
    %v394 = vpack.c.bf16 %v209, %v208
    %v395 = vpack.c.bf16 %v211, %v210
    %v396 = vpack.c.bf16 %v213, %v212
    %v397 = vpack.c.bf16 %v215, %v214
    %v398 = vpack.c.bf16 %v217, %v216
    %v399 = vpack.c.bf16 %v219, %v218
    %v400 = vpack.c.bf16 %v221, %v220
    %v401 = vpack.c.bf16 %v223, %v222
    %v402 = vpack.c.bf16 %v225, %v224
    %v403 = vpack.c.bf16 %v227, %v226
    %v404 = vpack.c.bf16 %v229, %v228
    %v405 = vpack.c.bf16 %v231, %v230
    %v406 = vpack.c.bf16 %v233, %v232
    %v407 = vpack.c.bf16 %v235, %v234
    %v408 = vpack.c.bf16 %v237, %v236
    %v409 = vpack.c.bf16 %v239, %v238
    %v410 = vpack.c.bf16 %v241, %v240
    %v411 = vpack.c.bf16 %v243, %v242
    %v412 = vpack.c.bf16 %v245, %v244
    %v413 = vpack.c.bf16 %v247, %v246
    %v414 = vpack.c.bf16 %v249, %v248
    %v415 = vpack.c.bf16 %v251, %v250
    %v416 = vpack.c.bf16 %v253, %v252
    %v417 = vpack.c.bf16 %v255, %v254
    %v418 = vpack.c.bf16 %v257, %v256
    %v419 = vpack.c.bf16 %v259, %v258
    %v420 = vpack.c.bf16 %v261, %v260
    %v421 = vpack.c.bf16 %v263, %v262
    %v422 = vpack.c.bf16 %v265, %v264
    %v423 = vpack.c.bf16 %v267, %v266
    %v424 = vpack.c.bf16 %v269, %v268
    %v425 = vpack.c.bf16 %v271, %v270
    %v426 = vpack.c.bf16 %v273, %v272
    %v427 = vpack.c.bf16 %v275, %v274
    %v428 = vpack.c.bf16 %v277, %v276
    %v429 = vpack.c.bf16 %v279, %v278
    %v430 = vpack.c.bf16 %v281, %v280
    %v431 = vpack.c.bf16 %v283, %v282
    %v432 = vpack.c.bf16 %v285, %v284
    %v433 = vpack.c.bf16 %v287, %v286
    %v434 = vpack.c.bf16 %v289, %v288
    %v435 = vpack.c.bf16 %v291, %v290
    %v436 = vpack.c.bf16 %v293, %v292
    %v437 = vpack.c.bf16 %v295, %v294
    %v438 = vpack.c.bf16 %v297, %v296
    %v439 = vpack.c.bf16 %v299, %v298
    %v440 = vpack.c.bf16 %v301, %v300
    %v441 = vpack.c.bf16 %v303, %v302
    %v442 = vpack.c.bf16 %v305, %v304
    %v443 = vpack.c.bf16 %v307, %v306
    %v444 = vpack.c.bf16 %v309, %v308
    %v445 = vpack.c.bf16 %v311, %v310
    %v446 = vpack.c.bf16 %v313, %v312
    %v447 = vpack.c.bf16 %v315, %v314
    %v448 = vpack.c.bf16 %v317, %v316
    %v449 = vpack.c.bf16 %v319, %v318
    %v450 = vpack.c.bf16 %v321, %v320
    %v451 = vpack.c.bf16 %v323, %v322
    %v452 = vld [vmem:[%s2] sm:$0x1]
    %v454 = vlaneseq
    %v455 = vshrl.u32 %v454, 7
    %v456 = vsub.s32 0, %v455
    %v457 = vrot.slane %v452, %v456
    %459 = vmatprep.subr.bf16.mxu0 0
    %460 = vmatpush1.bf16.msra.mxu0 %v324
    %461 = vmatprep.subr.bf16.mxu0 0
    %462 = vmatpush1.bf16.msra.mxu0 %v325
    %463 = vmatprep.subr.bf16.mxu0 0
    %464 = vmatpush1.bf16.msra.mxu0 %v326
    %465 = vmatprep.subr.bf16.mxu0 0
    %466 = vmatpush1.bf16.msra.mxu0 %v327
    %467 = vmatprep.subr.bf16.mxu0 0
    %468 = vmatpush1.bf16.msra.mxu0 %v328
    %469 = vmatprep.subr.bf16.mxu0 0
    %470 = vmatpush1.bf16.msra.mxu0 %v329
    %471 = vmatprep.subr.bf16.mxu0 0
    %472 = vmatpush1.bf16.msra.mxu0 %v330
    %473 = vmatprep.subr.bf16.mxu0 0
    %474 = vmatpush1.bf16.msra.mxu0 %v331
    %475 = vmatprep.subr.bf16.mxu0 0
    %476 = vmatpush1.bf16.msra.mxu0 %v332
    %477 = vmatprep.subr.bf16.mxu0 0
    %478 = vmatpush1.bf16.msra.mxu0 %v333
    %479 = vmatprep.subr.bf16.mxu0 0
    %480 = vmatpush1.bf16.msra.mxu0 %v334
    %481 = vmatprep.subr.bf16.mxu0 0
    %482 = vmatpush1.bf16.msra.mxu0 %v335
    %483 = vmatprep.subr.bf16.mxu0 0
    %484 = vmatpush1.bf16.msra.mxu0 %v336
    %485 = vmatprep.subr.bf16.mxu0 0
    %486 = vmatpush1.bf16.msra.mxu0 %v337
    %487 = vmatprep.subr.bf16.mxu0 0
    %488 = vmatpush1.bf16.msra.mxu0 %v338
    %489 = vmatprep.subr.bf16.mxu0 0
    %490 = vmatpush1.bf16.msra.mxu0 %v339
    %491 = vmatprep.mubr.bf16.mxu0 %v53
    %492 = vmatmul.mubr.bf16.gmra.mrb[0].mxu0 %v52
    %v493 = vpop.f32.mrb[0].mxu0
    %v494 = vadd.f32 %v457, %v493
    %v495 = vpop.f32.mrb[0].mxu0
    %v496 = vpop.f32.mrb[0].mxu0
    %v497 = vpop.f32.mrb[0].mxu0
    %498 = vdwg.mxu0
    %499 = vmatprep.subr.bf16.mxu0 0
    %500 = vmatpush1.bf16.msra.mxu0 %v340
    %501 = vmatprep.subr.bf16.mxu0 0
    %502 = vmatpush1.bf16.msra.mxu0 %v341
    %503 = vmatprep.subr.bf16.mxu0 0
    %504 = vmatpush1.bf16.msra.mxu0 %v342
    %505 = vmatprep.subr.bf16.mxu0 0
    %506 = vmatpush1.bf16.msra.mxu0 %v343
    %507 = vmatprep.subr.bf16.mxu0 0
    %508 = vmatpush1.bf16.msra.mxu0 %v344
    %509 = vmatprep.subr.bf16.mxu0 0
    %510 = vmatpush1.bf16.msra.mxu0 %v345
    %511 = vmatprep.subr.bf16.mxu0 0
    %512 = vmatpush1.bf16.msra.mxu0 %v346
    %513 = vmatprep.subr.bf16.mxu0 0
    %514 = vmatpush1.bf16.msra.mxu0 %v347
    %515 = vmatprep.subr.bf16.mxu0 0
    %516 = vmatpush1.bf16.msra.mxu0 %v348
    %517 = vmatprep.subr.bf16.mxu0 0
    %518 = vmatpush1.bf16.msra.mxu0 %v349
    %519 = vmatprep.subr.bf16.mxu0 0
    %520 = vmatpush1.bf16.msra.mxu0 %v350
    %521 = vmatprep.subr.bf16.mxu0 0
    %522 = vmatpush1.bf16.msra.mxu0 %v351
    %523 = vmatprep.subr.bf16.mxu0 0
    %524 = vmatpush1.bf16.msra.mxu0 %v352
    %525 = vmatprep.subr.bf16.mxu0 0
    %526 = vmatpush1.bf16.msra.mxu0 %v353
    %527 = vmatprep.subr.bf16.mxu0 0
    %528 = vmatpush1.bf16.msra.mxu0 %v354
    %529 = vmatprep.subr.bf16.mxu0 0
    %530 = vmatpush1.bf16.msra.mxu0 %v355
    %531 = vmatprep.mubr.bf16.mxu0 %v55
    %532 = vmatmul.mubr.bf16.gmra.mrb[0].mxu0 %v54
    %v533 = vpop.f32.mrb[0].mxu0
    %v534 = vadd.f32 %v494, %v533
    %v535 = vpop.f32.mrb[0].mxu0
    %v536 = vpop.f32.mrb[0].mxu0
    %v537 = vpop.f32.mrb[0].mxu0
    %538 = vdwg.mxu0
    %539 = vmatprep.subr.bf16.mxu0 0
    %540 = vmatpush1.bf16.msra.mxu0 %v356
    %541 = vmatprep.subr.bf16.mxu0 0
    %542 = vmatpush1.bf16.msra.mxu0 %v357
    %543 = vmatprep.subr.bf16.mxu0 0
    %544 = vmatpush1.bf16.msra.mxu0 %v358
    %545 = vmatprep.subr.bf16.mxu0 0
    %546 = vmatpush1.bf16.msra.mxu0 %v359
    %547 = vmatprep.subr.bf16.mxu0 0
    %548 = vmatpush1.bf16.msra.mxu0 %v360
    %549 = vmatprep.subr.bf16.mxu0 0
    %550 = vmatpush1.bf16.msra.mxu0 %v361
    %551 = vmatprep.subr.bf16.mxu0 0
    %552 = vmatpush1.bf16.msra.mxu0 %v362
    %553 = vmatprep.subr.bf16.mxu0 0
    %554 = vmatpush1.bf16.msra.mxu0 %v363
    %555 = vmatprep.subr.bf16.mxu0 0
    %556 = vmatpush1.bf16.msra.mxu0 %v364
    %557 = vmatprep.subr.bf16.mxu0 0
    %558 = vmatpush1.bf16.msra.mxu0 %v365
    %559 = vmatprep.subr.bf16.mxu0 0
    %560 = vmatpush1.bf16.msra.mxu0 %v366
    %561 = vmatprep.subr.bf16.mxu0 0
    %562 = vmatpush1.bf16.msra.mxu0 %v367
    %563 = vmatprep.subr.bf16.mxu0 0
    %564 = vmatpush1.bf16.msra.mxu0 %v368
    %565 = vmatprep.subr.bf16.mxu0 0
    %566 = vmatpush1.bf16.msra.mxu0 %v369
    %567 = vmatprep.subr.bf16.mxu0 0
    %568 = vmatpush1.bf16.msra.mxu0 %v370
    %569 = vmatprep.subr.bf16.mxu0 0
    %570 = vmatpush1.bf16.msra.mxu0 %v371
    %571 = vmatprep.mubr.bf16.mxu0 %v57
    %572 = vmatmul.mubr.bf16.gmra.mrb[0].mxu0 %v56
    %v573 = vpop.f32.mrb[0].mxu0
    %v574 = vadd.f32 %v534, %v573
    %v575 = vpop.f32.mrb[0].mxu0
    %v576 = vpop.f32.mrb[0].mxu0
    %v577 = vpop.f32.mrb[0].mxu0
    %578 = vdwg.mxu0
    %579 = vmatprep.subr.bf16.mxu0 0
    %580 = vmatpush1.bf16.msra.mxu0 %v372
    %581 = vmatprep.subr.bf16.mxu0 0
    %582 = vmatpush1.bf16.msra.mxu0 %v373
    %583 = vmatprep.subr.bf16.mxu0 0
    %584 = vmatpush1.bf16.msra.mxu0 %v374
    %585 = vmatprep.subr.bf16.mxu0 0
    %586 = vmatpush1.bf16.msra.mxu0 %v375
    %587 = vmatprep.subr.bf16.mxu0 0
    %588 = vmatpush1.bf16.msra.mxu0 %v376
    %589 = vmatprep.subr.bf16.mxu0 0
    %590 = vmatpush1.bf16.msra.mxu0 %v377
    %591 = vmatprep.subr.bf16.mxu0 0
    %592 = vmatpush1.bf16.msra.mxu0 %v378
    %593 = vmatprep.subr.bf16.mxu0 0
    %594 = vmatpush1.bf16.msra.mxu0 %v379
    %595 = vmatprep.subr.bf16.mxu0 0
    %596 = vmatpush1.bf16.msra.mxu0 %v380
    %597 = vmatprep.subr.bf16.mxu0 0
    %598 = vmatpush1.bf16.msra.mxu0 %v381
    %599 = vmatprep.subr.bf16.mxu0 0
    %600 = vmatpush1.bf16.msra.mxu0 %v382
    %601 = vmatprep.subr.bf16.mxu0 0
    %602 = vmatpush1.bf16.msra.mxu0 %v383
    %603 = vmatprep.subr.bf16.mxu0 0
    %604 = vmatpush1.bf16.msra.mxu0 %v384
    %605 = vmatprep.subr.bf16.mxu0 0
    %606 = vmatpush1.bf16.msra.mxu0 %v385
    %607 = vmatprep.subr.bf16.mxu0 0
    %608 = vmatpush1.bf16.msra.mxu0 %v386
    %609 = vmatprep.subr.bf16.mxu0 0
    %610 = vmatpush1.bf16.msra.mxu0 %v387
    %611 = vmatprep.mubr.bf16.mxu0 %v59
    %612 = vmatmul.mubr.bf16.gmra.mrb[0].mxu0 %v58
    %v613 = vpop.f32.mrb[0].mxu0
    %v614 = vadd.f32 %v574, %v613
    %v615 = vpop.f32.mrb[0].mxu0
    %v616 = vpop.f32.mrb[0].mxu0
    %v617 = vpop.f32.mrb[0].mxu0
    %618 = vdwg.mxu0
    %619 = vmatprep.subr.bf16.mxu0 0
    %620 = vmatpush1.bf16.msra.mxu0 %v388
    %621 = vmatprep.subr.bf16.mxu0 0
    %622 = vmatpush1.bf16.msra.mxu0 %v389
    %623 = vmatprep.subr.bf16.mxu0 0
    %624 = vmatpush1.bf16.msra.mxu0 %v390
    %625 = vmatprep.subr.bf16.mxu0 0
    %626 = vmatpush1.bf16.msra.mxu0 %v391
    %627 = vmatprep.subr.bf16.mxu0 0
    %628 = vmatpush1.bf16.msra.mxu0 %v392
    %629 = vmatprep.subr.bf16.mxu0 0
    %630 = vmatpush1.bf16.msra.mxu0 %v393
    %631 = vmatprep.subr.bf16.mxu0 0
    %632 = vmatpush1.bf16.msra.mxu0 %v394
    %633 = vmatprep.subr.bf16.mxu0 0
    %634 = vmatpush1.bf16.msra.mxu0 %v395
    %635 = vmatprep.subr.bf16.mxu0 0
    %636 = vmatpush1.bf16.msra.mxu0 %v396
    %637 = vmatprep.subr.bf16.mxu0 0
    %638 = vmatpush1.bf16.msra.mxu0 %v397
    %639 = vmatprep.subr.bf16.mxu0 0
    %640 = vmatpush1.bf16.msra.mxu0 %v398
    %641 = vmatprep.subr.bf16.mxu0 0
    %642 = vmatpush1.bf16.msra.mxu0 %v399
    %643 = vmatprep.subr.bf16.mxu0 0
    %644 = vmatpush1.bf16.msra.mxu0 %v400
    %645 = vmatprep.subr.bf16.mxu0 0
    %646 = vmatpush1.bf16.msra.mxu0 %v401
    %647 = vmatprep.subr.bf16.mxu0 0
    %648 = vmatpush1.bf16.msra.mxu0 %v402
    %649 = vmatprep.subr.bf16.mxu0 0
    %650 = vmatpush1.bf16.msra.mxu0 %v403
    %651 = vmatprep.mubr.bf16.mxu0 %v61
    %652 = vmatmul.mubr.bf16.gmra.mrb[0].mxu0 %v60
    %v653 = vpop.f32.mrb[0].mxu0
    %v654 = vadd.f32 %v614, %v653
    %v655 = vpop.f32.mrb[0].mxu0
    %v656 = vpop.f32.mrb[0].mxu0
    %v657 = vpop.f32.mrb[0].mxu0
    %658 = vdwg.mxu0
    %659 = vmatprep.subr.bf16.mxu0 0
    %660 = vmatpush1.bf16.msra.mxu0 %v404
    %661 = vmatprep.subr.bf16.mxu0 0
    %662 = vmatpush1.bf16.msra.mxu0 %v405
    %663 = vmatprep.subr.bf16.mxu0 0
    %664 = vmatpush1.bf16.msra.mxu0 %v406
    %665 = vmatprep.subr.bf16.mxu0 0
    %666 = vmatpush1.bf16.msra.mxu0 %v407
    %667 = vmatprep.subr.bf16.mxu0 0
    %668 = vmatpush1.bf16.msra.mxu0 %v408
    %669 = vmatprep.subr.bf16.mxu0 0
    %670 = vmatpush1.bf16.msra.mxu0 %v409
    %671 = vmatprep.subr.bf16.mxu0 0
    %672 = vmatpush1.bf16.msra.mxu0 %v410
    %673 = vmatprep.subr.bf16.mxu0 0
    %674 = vmatpush1.bf16.msra.mxu0 %v411
    %675 = vmatprep.subr.bf16.mxu0 0
    %676 = vmatpush1.bf16.msra.mxu0 %v412
    %677 = vmatprep.subr.bf16.mxu0 0
    %678 = vmatpush1.bf16.msra.mxu0 %v413
    %679 = vmatprep.subr.bf16.mxu0 0
    %680 = vmatpush1.bf16.msra.mxu0 %v414
    %681 = vmatprep.subr.bf16.mxu0 0
    %682 = vmatpush1.bf16.msra.mxu0 %v415
    %683 = vmatprep.subr.bf16.mxu0 0
    %684 = vmatpush1.bf16.msra.mxu0 %v416
    %685 = vmatprep.subr.bf16.mxu0 0
    %686 = vmatpush1.bf16.msra.mxu0 %v417
    %687 = vmatprep.subr.bf16.mxu0 0
    %688 = vmatpush1.bf16.msra.mxu0 %v418
    %689 = vmatprep.subr.bf16.mxu0 0
    %690 = vmatpush1.bf16.msra.mxu0 %v419
    %691 = vmatprep.mubr.bf16.mxu0 %v63
    %692 = vmatmul.mubr.bf16.gmra.mrb[0].mxu0 %v62
    %v693 = vpop.f32.mrb[0].mxu0
    %v694 = vadd.f32 %v654, %v693
    %v695 = vpop.f32.mrb[0].mxu0
    %v696 = vpop.f32.mrb[0].mxu0
    %v697 = vpop.f32.mrb[0].mxu0
    %698 = vdwg.mxu0
    %699 = vmatprep.subr.bf16.mxu0 0
    %700 = vmatpush1.bf16.msra.mxu0 %v420
    %701 = vmatprep.subr.bf16.mxu0 0
    %702 = vmatpush1.bf16.msra.mxu0 %v421
    %703 = vmatprep.subr.bf16.mxu0 0
    %704 = vmatpush1.bf16.msra.mxu0 %v422
    %705 = vmatprep.subr.bf16.mxu0 0
    %706 = vmatpush1.bf16.msra.mxu0 %v423
    %707 = vmatprep.subr.bf16.mxu0 0
    %708 = vmatpush1.bf16.msra.mxu0 %v424
    %709 = vmatprep.subr.bf16.mxu0 0
    %710 = vmatpush1.bf16.msra.mxu0 %v425
    %711 = vmatprep.subr.bf16.mxu0 0
    %712 = vmatpush1.bf16.msra.mxu0 %v426
    %713 = vmatprep.subr.bf16.mxu0 0
    %714 = vmatpush1.bf16.msra.mxu0 %v427
    %715 = vmatprep.subr.bf16.mxu0 0
    %716 = vmatpush1.bf16.msra.mxu0 %v428
    %717 = vmatprep.subr.bf16.mxu0 0
    %718 = vmatpush1.bf16.msra.mxu0 %v429
    %719 = vmatprep.subr.bf16.mxu0 0
    %720 = vmatpush1.bf16.msra.mxu0 %v430
    %721 = vmatprep.subr.bf16.mxu0 0
    %722 = vmatpush1.bf16.msra.mxu0 %v431
    %723 = vmatprep.subr.bf16.mxu0 0
    %724 = vmatpush1.bf16.msra.mxu0 %v432
    %725 = vmatprep.subr.bf16.mxu0 0
    %726 = vmatpush1.bf16.msra.mxu0 %v433
    %727 = vmatprep.subr.bf16.mxu0 0
    %728 = vmatpush1.bf16.msra.mxu0 %v434
    %729 = vmatprep.subr.bf16.mxu0 0
    %730 = vmatpush1.bf16.msra.mxu0 %v435
    %731 = vmatprep.mubr.bf16.mxu0 %v65
    %732 = vmatmul.mubr.bf16.gmra.mrb[0].mxu0 %v64
    %v733 = vpop.f32.mrb[0].mxu0
    %v734 = vadd.f32 %v694, %v733
    %v735 = vpop.f32.mrb[0].mxu0
    %v736 = vpop.f32.mrb[0].mxu0
    %v737 = vpop.f32.mrb[0].mxu0
    %738 = vdwg.mxu0
    %739 = vmatprep.subr.bf16.mxu0 0
    %740 = vmatpush1.bf16.msra.mxu0 %v436
    %741 = vmatprep.subr.bf16.mxu0 0
    %742 = vmatpush1.bf16.msra.mxu0 %v437
    %743 = vmatprep.subr.bf16.mxu0 0
    %744 = vmatpush1.bf16.msra.mxu0 %v438
    %745 = vmatprep.subr.bf16.mxu0 0
    %746 = vmatpush1.bf16.msra.mxu0 %v439
    %747 = vmatprep.subr.bf16.mxu0 0
    %748 = vmatpush1.bf16.msra.mxu0 %v440
    %749 = vmatprep.subr.bf16.mxu0 0
    %750 = vmatpush1.bf16.msra.mxu0 %v441
    %751 = vmatprep.subr.bf16.mxu0 0
    %752 = vmatpush1.bf16.msra.mxu0 %v442
    %753 = vmatprep.subr.bf16.mxu0 0
    %754 = vmatpush1.bf16.msra.mxu0 %v443
    %755 = vmatprep.subr.bf16.mxu0 0
    %756 = vmatpush1.bf16.msra.mxu0 %v444
    %757 = vmatprep.subr.bf16.mxu0 0
    %758 = vmatpush1.bf16.msra.mxu0 %v445
    %759 = vmatprep.subr.bf16.mxu0 0
    %760 = vmatpush1.bf16.msra.mxu0 %v446
    %761 = vmatprep.subr.bf16.mxu0 0
    %762 = vmatpush1.bf16.msra.mxu0 %v447
    %763 = vmatprep.subr.bf16.mxu0 0
    %764 = vmatpush1.bf16.msra.mxu0 %v448
    %765 = vmatprep.subr.bf16.mxu0 0
    %766 = vmatpush1.bf16.msra.mxu0 %v449
    %767 = vmatprep.subr.bf16.mxu0 0
    %768 = vmatpush1.bf16.msra.mxu0 %v450
    %769 = vmatprep.subr.bf16.mxu0 0
    %770 = vmatpush1.bf16.msra.mxu0 %v451
    %771 = vmatprep.mubr.bf16.mxu0 %v67
    %772 = vmatmul.mubr.bf16.gmra.mrb[0].mxu0 %v66
    %v773 = vpop.f32.mrb[0].mxu0
    %v774 = vadd.f32 %v734, %v773
    %v775 = vpop.f32.mrb[0].mxu0
    %v776 = vpop.f32.mrb[0].mxu0
    %v777 = vpop.f32.mrb[0].mxu0
    %778 = vdwg.mxu0
    %v779 = vpack.c.bf16 %v774, %v774
    %v780 = vld [vmem:[%s3] sm:$0xff]
    %v781 = vld [vmem:[%s3 + $0x8] sm:$0xff]
    %v782 = vld [vmem:[%s3 + $0x10] sm:$0xff]
    %v783 = vld [vmem:[%s3 + $0x18] sm:$0xff]
    %v784 = vld [vmem:[%s3 + $0x20] sm:$0xff]
    %v785 = vld [vmem:[%s3 + $0x28] sm:$0xff]
    %v786 = vld [vmem:[%s3 + $0x30] sm:$0xff]
    %v787 = vld [vmem:[%s3 + $0x38] sm:$0xff]
    %v788 = vld [vmem:[%s3 + $0x40] sm:$0xff]
    %v789 = vld [vmem:[%s3 + $0x48] sm:$0xff]
    %v790 = vld [vmem:[%s3 + $0x50] sm:$0xff]
    %v791 = vld [vmem:[%s3 + $0x58] sm:$0xff]
    %v792 = vld [vmem:[%s3 + $0x60] sm:$0xff]
    %v793 = vld [vmem:[%s3 + $0x68] sm:$0xff]
    %v794 = vld [vmem:[%s3 + $0x70] sm:$0xff]
    %v795 = vld [vmem:[%s3 + $0x78] sm:$0xff]
    %v796 = vpack.c.bf16 %v781, %v780
    %v797 = vpack.c.bf16 %v783, %v782
    %v798 = vpack.c.bf16 %v785, %v784
    %v799 = vpack.c.bf16 %v787, %v786
    %v800 = vpack.c.bf16 %v789, %v788
    %v801 = vpack.c.bf16 %v791, %v790
    %v802 = vpack.c.bf16 %v793, %v792
    %v803 = vpack.c.bf16 %v795, %v794
    %v804 = vld [vmem:[%s4] sm:$0x1]
    %v806 = vlaneseq
    %v807 = vshrl.u32 %v806, 7
    %v808 = vsub.s32 0, %v807
    %v809 = vrot.slane %v804, %v808
    %811 = vmatprep.subr.bf16.mxu0 0
    %812 = vmatpush1.bf16.msra.mxu0 %v796
    %813 = vmatprep.subr.bf16.mxu0 0
    %814 = vmatpush1.bf16.msra.mxu0 %v797
    %815 = vmatprep.subr.bf16.mxu0 0
    %816 = vmatpush1.bf16.msra.mxu0 %v798
    %817 = vmatprep.subr.bf16.mxu0 0
    %818 = vmatpush1.bf16.msra.mxu0 %v799
    %819 = vmatprep.subr.bf16.mxu0 0
    %820 = vmatpush1.bf16.msra.mxu0 %v800
    %821 = vmatprep.subr.bf16.mxu0 0
    %822 = vmatpush1.bf16.msra.mxu0 %v801
    %823 = vmatprep.subr.bf16.mxu0 0
    %824 = vmatpush1.bf16.msra.mxu0 %v802
    %825 = vmatprep.subr.bf16.mxu0 0
    %826 = vmatpush1.bf16.msra.mxu0 %v803
    %827 = vmatprep.subr.bf16.mxu0 0
    %828 = vmatpush1.bf16.msra.mxu0 0
    %829 = vmatprep.subr.bf16.mxu0 0
    %830 = vmatpush1.bf16.msra.mxu0 0
    %831 = vmatprep.subr.bf16.mxu0 0
    %832 = vmatpush1.bf16.msra.mxu0 0
    %833 = vmatprep.subr.bf16.mxu0 0
    %834 = vmatpush1.bf16.msra.mxu0 0
    %835 = vmatprep.subr.bf16.mxu0 0
    %836 = vmatpush1.bf16.msra.mxu0 0
    %837 = vmatprep.subr.bf16.mxu0 0
    %838 = vmatpush1.bf16.msra.mxu0 0
    %839 = vmatprep.subr.bf16.mxu0 0
    %840 = vmatpush1.bf16.msra.mxu0 0
    %841 = vmatprep.subr.bf16.mxu0 0
    %842 = vmatpush1.bf16.msra.mxu0 0
    %843 = vmatprep.mubr.bf16.mxu0 0
    %844 = vmatmul.mubr.bf16.gmra.mrb[0].mxu0 %v779
    %v845 = vpop.f32.mrb[0].mxu0
    %v846 = vadd.f32 %v809, %v845
    %v847 = vpop.f32.mrb[0].mxu0
    %v848 = vpop.f32.mrb[0].mxu0
    %v849 = vpop.f32.mrb[0].mxu0
    %850 = vdwg.mxu0
    %vm851 = vcmask 818176
    %852 = vst.msk [vmem:[#allocation5] sm:$0xff] %vm851, %v846
    // Predicated region
    $region26: #{tpu_custom_call.1} parent=1 // pred_check
      _
    $region27: #{tpu_custom_call.1} parent=1 // pred_check_branch
      %854 = sbr.rel (0) target = $region29
    $region28: #{tpu_custom_call.1} parent=1 // pred_region
      %s856 = ssub.s32 128, 128
      %857 = vsyncadd [#allocation4], %s856
      %s859 = sshll.u32 [#allocation5], 4
      %s860 = int_to_ptr.vmem [resolvable:$true] %s859
      %862 = dma.vmem_to_hbm [thread:$0]  %s860, 128, %s5, [#allocation4]
    $region29: #{tpu_custom_call.1} parent=1 // pred_fallthru
      _
    // Predicated region
    $region30: #{tpu_custom_call.1} parent=1 // pred_check
      _
    $region31: #{tpu_custom_call.1} parent=1 // pred_check_branch
      %864 = sbr.rel (0) target = $region33
    $region32: #{tpu_custom_call.1} parent=1 // pred_region
      %865 = dma.done [#allocation4], 128
    $region33: #{tpu_custom_call.1} parent=1 // pred_fallthru
      _
    %866 = vsyncpa [#allocation3], 1
    %867 = vsyncpa [#allocation4], 1

</llo_original>
